<compile_context>
chip_gen: v5e
topology: v5e:2x2
jax: 0.10.0
libtpu: 0.0.40
codegen_flags: <defaults>
</compile_context>

<pallas_src>
import math

import jax
import jax.numpy as jnp
import numpy as np
from jax.experimental import pallas as pl
from jax.experimental.pallas import tpu as pltpu


def make_mhsa_kernel(n_heads, d_key, d_model, seq_len, bblk):
    H, Dk, D, S = n_heads, d_key, d_model, seq_len
    HDk = H * Dk

    def kernel(x_ref, wqkv_ref, bqkv_ref, wo_ref, bo_ref, out_ref):
        # (BBLK, S, D) -> (BBLK*S, D): fill the MXU M dimension with all rows at once.
        x = x_ref[...].reshape(bblk * S, D)                       # bf16

        # Single fused, lane-dense QKV projection (bf16 MXU, f32 accumulate) + f32 bias.
        qkv = jnp.dot(x, wqkv_ref[...],
                      preferred_element_type=jnp.float32) + bqkv_ref[...]

        # Static lane sub-ranges of the fused projection (scale already folded into Wq/bq).
        q = qkv[:, :HDk].astype(jnp.bfloat16)                     # (BBLK*S, H*Dk)
        k = qkv[:, HDk:2 * HDk].astype(jnp.bfloat16)              # (BBLK*S, H*Dk)
        v = qkv[:, 2 * HDk:].astype(jnp.bfloat16)                 # (BBLK*S, H*D)

        # Head-batched layout: leading dim = (batch-in-block, head).
        qh = jnp.stack([q[b * S:(b + 1) * S, h * Dk:(h + 1) * Dk]
                        for b in range(bblk) for h in range(H)], axis=0)   # (BBLK*H, S, Dk)
        kh = jnp.stack([k[b * S:(b + 1) * S, h * Dk:(h + 1) * Dk]
                        for b in range(bblk) for h in range(H)], axis=0)   # (BBLK*H, S, Dk)
        vh = jnp.stack([v[b * S:(b + 1) * S, h * D:(h + 1) * D]
                        for b in range(bblk) for h in range(H)], axis=0)   # (BBLK*H, S, D)

        # Batched scores: contract last dims (no explicit transpose), f32 accumulation.
        s = jnp.einsum('bqd,bkd->bqk', qh, kh,
                       preferred_element_type=jnp.float32)         # (BBLK*H, S, S)

        # Numerically stable softmax in f32; exact EUP reciprocal.
        m = jnp.max(s, axis=-1, keepdims=True)
        p = jnp.exp(s - m)
        a = p * pl.reciprocal(jnp.sum(p, axis=-1, keepdims=True), approx=False)

        # Batched P @ V.
        z = jnp.einsum('bqk,bkd->bqd', a.astype(jnp.bfloat16), vh,
                       preferred_element_type=jnp.float32)         # (BBLK*H, S, D)

        # Concat heads in registers (no VMEM scratch) and run ONE output projection
        # with full contraction depth K = H*D per batch element.
        for b in range(bblk):
            zc = jnp.concatenate([z[b * H + h] for h in range(H)], axis=-1)  # (S, H*D)
            out = jnp.dot(zc.astype(jnp.bfloat16), wo_ref[...],
                          preferred_element_type=jnp.float32) + bo_ref[...]
            out_ref[b] = out.astype(out_ref.dtype)

    return kernel


def multi_head_self_attention(x, params, batch_block=None):
    """x: (B, S, D) f32. params: dict of stacked per-head weights (see init_params)."""
    B, S, D = x.shape
    H, _, Dk = params["wq"].shape
    scale = 1.0 / math.sqrt(Dk)

    # --- host-side one-time parameter transforms -----------------------------------
    # Fuse per-head weights into a single lane-dense Wqkv; fold the softmax scale into
    # Wq / bq so the kernel never multiplies by 1/sqrt(d_key).
    wq = (jnp.transpose(params["wq"], (1, 0, 2)) * scale).reshape(D, H * Dk)
    wk = jnp.transpose(params["wk"], (1, 0, 2)).reshape(D, H * Dk)
    wv = jnp.transpose(params["wv"], (1, 0, 2)).reshape(D, H * D)
    wqkv = jnp.concatenate([wq, wk, wv], axis=1).astype(jnp.bfloat16)   # (D, 2*H*Dk + H*D)

    bqkv = jnp.concatenate([params["bq"].reshape(-1) * scale,
                            params["bk"].reshape(-1),
                            params["bv"].reshape(-1)]).reshape(1, -1).astype(jnp.float32)

    wo = params["wo"].astype(jnp.bfloat16)                              # (H*D, D)
    bo = params["bo"].reshape(1, D).astype(jnp.float32)

    xb = x.astype(jnp.bfloat16)
    Wtot = wqkv.shape[1]

    # Batch blocking: amortize per-grid-step overhead for larger B while keeping at
    # least 2 grid steps so both v7x TensorCores stay busy.
    if batch_block is None:
        batch_block = B // 2 if (B % 2 == 0 and B >= 4) else 1
    if B % batch_block != 0:
        batch_block = 1
    bblk = batch_block
    grid = (B // bblk,)

    kernel = make_mhsa_kernel(H, Dk, D, S, bblk)
    out = pl.pallas_call(
        kernel,
        out_shape=jax.ShapeDtypeStruct((B, S, D), jnp.float32),
        grid_spec=pltpu.PrefetchScalarGridSpec(
            num_scalar_prefetch=0,
            grid=grid,
            in_specs=[
                pl.BlockSpec((bblk, S, D), lambda b: (b, 0, 0)),   # x
                pl.BlockSpec((D, Wtot),    lambda b: (0, 0)),      # fused Wqkv
                pl.BlockSpec((1, Wtot),    lambda b: (0, 0)),      # fused bqkv (scaled bq)
                pl.BlockSpec((H * D, D),   lambda b: (0, 0)),      # Wo
                pl.BlockSpec((1, D),       lambda b: (0, 0)),      # bo
            ],
            out_specs=pl.BlockSpec((bblk, S, D), lambda b: (b, 0, 0)),
        ),
        compiler_params=pltpu.CompilerParams(
            dimension_semantics=("parallel",)),
    )(xb, wqkv, bqkv, wo, bo)
    return out


def reference_mhsa(x, params):
    """Pure-JAX f32 reference matching the PyTorch module semantics."""
    H = params["wq"].shape[0]
    heads = []
    for h in range(H):
        q = x @ params["wq"][h] + params["bq"][h]
        k = x @ params["wk"][h] + params["bk"][h]
        v = x @ params["wv"][h] + params["bv"][h]
        a = q @ jnp.swapaxes(k, -2, -1) / (k.shape[-1] ** 0.5)
        a = jax.nn.softmax(a, axis=-1)
        heads.append(a @ v)
    cat = jnp.concatenate(heads, axis=-1)
    return cat @ params["wo"] + params["bo"]


def init_params(key, d_model, d_key, n_heads):
    ks = jax.random.split(key, 8)
    s = 1.0 / math.sqrt(d_model)
    params = {
        "wq": jax.random.uniform(ks[0], (n_heads, d_model, d_key), jnp.float32, -s, s),
        "bq": jax.random.uniform(ks[1], (n_heads, d_key), jnp.float32, -s, s),
        "wk": jax.random.uniform(ks[2], (n_heads, d_model, d_key), jnp.float32, -s, s),
        "bk": jax.random.uniform(ks[3], (n_heads, d_key), jnp.float32, -s, s),
        "wv": jax.random.uniform(ks[4], (n_heads, d_model, d_model), jnp.float32, -s, s),
        "bv": jax.random.uniform(ks[5], (n_heads, d_model), jnp.float32, -s, s),
        "wo": jax.random.uniform(ks[6], (n_heads * d_model, d_model), jnp.float32, -s, s),
        "bo": jax.random.uniform(ks[7], (d_model,), jnp.float32, -s, s),
    }
    return params


if __name__ == "__main__":
    B, S = 2, 8
    d_model, d_key, n_heads = 32, 16, 4

    key = jax.random.PRNGKey(0)
    kx, kp = jax.random.split(key)
    x = jax.random.normal(kx, (B, S, d_model), jnp.float32)
    params = init_params(kp, d_model, d_key, n_heads)

    out = multi_head_self_attention(x, params)
    out = jax.block_until_ready(out)

    ref = reference_mhsa(x, params)
    # bf16 matmul operands (f32 accumulation) -> loosened tolerance.
    np.testing.assert_allclose(np.asarray(out), np.asarray(ref), rtol=2e-2, atol=2e-2)

    print("KERNEL_OK")
</pallas_src>

<mosaic_0001>
module attributes {stable_mosaic.version = 11 : i64} {
  func.func @kernel(%arg0: i32, %arg1: memref<1x8x32xbf16, #tpu.memory_space<vmem>>, %arg2: memref<32x256xbf16, #tpu.memory_space<vmem>>, %arg3: memref<1x256xf32, #tpu.memory_space<vmem>>, %arg4: memref<128x32xbf16, #tpu.memory_space<vmem>>, %arg5: memref<1x32xf32, #tpu.memory_space<vmem>>, %arg6: memref<1x8x32xf32, #tpu.memory_space<vmem>>) attributes {dimension_semantics = [#tpu.dimension_semantics<parallel>], iteration_bounds = array<i64: 2>, scalar_prefetch = 0 : i64, scratch_operands = 0 : i64, tpu.core_type = #tpu.core_type<tc>, window_params = [{transform_indices = @transform_0, window_bounds = array<i64: 1, 8, 32>}, {pipeline_mode = #tpu.pipeline_mode<synchronous>, transform_indices = @transform_1, window_bounds = array<i64: 32, 256>}, {pipeline_mode = #tpu.pipeline_mode<synchronous>, transform_indices = @transform_2, window_bounds = array<i64: 1, 256>}, {pipeline_mode = #tpu.pipeline_mode<synchronous>, transform_indices = @transform_3, window_bounds = array<i64: 128, 32>}, {pipeline_mode = #tpu.pipeline_mode<synchronous>, transform_indices = @transform_4, window_bounds = array<i64: 1, 32>}, {transform_indices = @transform_5, window_bounds = array<i64: 1, 8, 32>}]} {
    %c0 = arith.constant 0 : index
    %c0_0 = arith.constant 0 : index
    %c0_1 = arith.constant 0 : index
    %0 = vector.load %arg1[%c0, %c0_0, %c0_1] : memref<1x8x32xbf16, #tpu.memory_space<vmem>>, vector<1x8x32xbf16>
    %1 = vector.shape_cast %0 : vector<1x8x32xbf16> to vector<8x32xbf16>
    %c0_2 = arith.constant 0 : index
    %c0_3 = arith.constant 0 : index
    %2 = vector.load %arg2[%c0_2, %c0_3] : memref<32x256xbf16, #tpu.memory_space<vmem>>, vector<32x256xbf16>
    %cst = arith.constant dense<0.000000e+00> : vector<8x256xf32>
    %3 = tpu.matmul %1, %2, %cst {dimension_numbers = #tpu.dot_dimension_numbers<[1], [0], [0], [1], [0, 0, 1, 1], [], []>} : vector<8x32xbf16>, vector<32x256xbf16>, vector<8x256xf32> -> vector<8x256xf32>
    %c0_4 = arith.constant 0 : index
    %c0_5 = arith.constant 0 : index
    %4 = vector.load %arg3[%c0_4, %c0_5] : memref<1x256xf32, #tpu.memory_space<vmem>>, vector<1x256xf32>
    %5 = vector.broadcast %4 : vector<1x256xf32> to vector<8x256xf32>
    %6 = arith.addf %3, %5 : vector<8x256xf32>
    %7 = vector.extract_strided_slice %6 {offsets = [0, 0], sizes = [8, 64], strides = [1, 1]} : vector<8x256xf32> to vector<8x64xf32>
    %8 = arith.truncf %7 : vector<8x64xf32> to vector<8x64xbf16>
    %9 = vector.extract_strided_slice %6 {offsets = [0, 64], sizes = [8, 64], strides = [1, 1]} : vector<8x256xf32> to vector<8x64xf32>
    %10 = arith.truncf %9 : vector<8x64xf32> to vector<8x64xbf16>
    %11 = vector.extract_strided_slice %6 {offsets = [0, 128], sizes = [8, 128], strides = [1, 1]} : vector<8x256xf32> to vector<8x128xf32>
    %12 = arith.truncf %11 : vector<8x128xf32> to vector<8x128xbf16>
    %13 = vector.extract_strided_slice %8 {offsets = [0, 0], sizes = [8, 16], strides = [1, 1]} : vector<8x64xbf16> to vector<8x16xbf16>
    %14 = vector.extract_strided_slice %8 {offsets = [0, 16], sizes = [8, 16], strides = [1, 1]} : vector<8x64xbf16> to vector<8x16xbf16>
    %15 = vector.extract_strided_slice %8 {offsets = [0, 32], sizes = [8, 16], strides = [1, 1]} : vector<8x64xbf16> to vector<8x16xbf16>
    %16 = vector.extract_strided_slice %8 {offsets = [0, 48], sizes = [8, 16], strides = [1, 1]} : vector<8x64xbf16> to vector<8x16xbf16>
    %17 = vector.shape_cast %13 : vector<8x16xbf16> to vector<1x8x16xbf16>
    %18 = vector.shape_cast %14 : vector<8x16xbf16> to vector<1x8x16xbf16>
    %19 = vector.shape_cast %15 : vector<8x16xbf16> to vector<1x8x16xbf16>
    %20 = vector.shape_cast %16 : vector<8x16xbf16> to vector<1x8x16xbf16>
    %21 = tpu.concatenate %17, %18, %19, %20 in 0 : vector<1x8x16xbf16>, vector<1x8x16xbf16>, vector<1x8x16xbf16>, vector<1x8x16xbf16> -> vector<4x8x16xbf16>
    %22 = vector.extract_strided_slice %10 {offsets = [0, 0], sizes = [8, 16], strides = [1, 1]} : vector<8x64xbf16> to vector<8x16xbf16>
    %23 = vector.extract_strided_slice %10 {offsets = [0, 16], sizes = [8, 16], strides = [1, 1]} : vector<8x64xbf16> to vector<8x16xbf16>
    %24 = vector.extract_strided_slice %10 {offsets = [0, 32], sizes = [8, 16], strides = [1, 1]} : vector<8x64xbf16> to vector<8x16xbf16>
    %25 = vector.extract_strided_slice %10 {offsets = [0, 48], sizes = [8, 16], strides = [1, 1]} : vector<8x64xbf16> to vector<8x16xbf16>
    %26 = vector.shape_cast %22 : vector<8x16xbf16> to vector<1x8x16xbf16>
    %27 = vector.shape_cast %23 : vector<8x16xbf16> to vector<1x8x16xbf16>
    %28 = vector.shape_cast %24 : vector<8x16xbf16> to vector<1x8x16xbf16>
    %29 = vector.shape_cast %25 : vector<8x16xbf16> to vector<1x8x16xbf16>
    %30 = tpu.concatenate %26, %27, %28, %29 in 0 : vector<1x8x16xbf16>, vector<1x8x16xbf16>, vector<1x8x16xbf16>, vector<1x8x16xbf16> -> vector<4x8x16xbf16>
    %31 = vector.extract_strided_slice %12 {offsets = [0, 0], sizes = [8, 32], strides = [1, 1]} : vector<8x128xbf16> to vector<8x32xbf16>
    %32 = vector.extract_strided_slice %12 {offsets = [0, 32], sizes = [8, 32], strides = [1, 1]} : vector<8x128xbf16> to vector<8x32xbf16>
    %33 = vector.extract_strided_slice %12 {offsets = [0, 64], sizes = [8, 32], strides = [1, 1]} : vector<8x128xbf16> to vector<8x32xbf16>
    %34 = vector.extract_strided_slice %12 {offsets = [0, 96], sizes = [8, 32], strides = [1, 1]} : vector<8x128xbf16> to vector<8x32xbf16>
    %35 = vector.shape_cast %31 : vector<8x32xbf16> to vector<1x8x32xbf16>
    %36 = vector.shape_cast %32 : vector<8x32xbf16> to vector<1x8x32xbf16>
    %37 = vector.shape_cast %33 : vector<8x32xbf16> to vector<1x8x32xbf16>
    %38 = vector.shape_cast %34 : vector<8x32xbf16> to vector<1x8x32xbf16>
    %39 = tpu.concatenate %35, %36, %37, %38 in 0 : vector<1x8x32xbf16>, vector<1x8x32xbf16>, vector<1x8x32xbf16>, vector<1x8x32xbf16> -> vector<4x8x32xbf16>
    "tpu.trace_start"() <{level = 10 : i32, message = "bqd,bkd->bqk"}> : () -> ()
    %cst_6 = arith.constant dense<0.000000e+00> : vector<4x8x8xf32>
    %40 = tpu.matmul %21, %30, %cst_6 {dimension_numbers = #tpu.dot_dimension_numbers<[2], [2], [1], [1], [0, 0, 0, 1, 1, 1], [0], [0]>} : vector<4x8x16xbf16>, vector<4x8x16xbf16>, vector<4x8x8xf32> -> vector<4x8x8xf32>
    "tpu.trace_stop"() : () -> ()
    %cst_7 = arith.constant dense<0xFF800000> : vector<4x8xf32>
    %41 = vector.multi_reduction <maximumf>, %40, %cst_7 [2] : vector<4x8x8xf32> to vector<4x8xf32>
    %42 = vector.shape_cast %41 : vector<4x8xf32> to vector<4x8x1xf32>
    %43 = vector.broadcast %42 : vector<4x8x1xf32> to vector<4x8x8xf32>
    %44 = arith.subf %40, %43 : vector<4x8x8xf32>
    %45 = math.exp %44 : vector<4x8x8xf32>
    %cst_8 = arith.constant dense<0.000000e+00> : vector<4x8xf32>
    %46 = vector.multi_reduction <add>, %45, %cst_8 [2] : vector<4x8x8xf32> to vector<4x8xf32>
    %47 = vector.shape_cast %46 : vector<4x8xf32> to vector<4x8x1xf32>
    %48 = tpu.reciprocal %47 : vector<4x8x1xf32> -> vector<4x8x1xf32>
    %49 = vector.broadcast %48 : vector<4x8x1xf32> to vector<4x8x8xf32>
    %50 = arith.mulf %45, %49 : vector<4x8x8xf32>
    %51 = arith.truncf %50 : vector<4x8x8xf32> to vector<4x8x8xbf16>
    "tpu.trace_start"() <{level = 10 : i32, message = "bqk,bkd->bqd"}> : () -> ()
    %cst_9 = arith.constant dense<0.000000e+00> : vector<4x8x32xf32>
    %52 = tpu.matmul %51, %39, %cst_9 {dimension_numbers = #tpu.dot_dimension_numbers<[2], [1], [1], [2], [0, 0, 0, 1, 1, 2], [0], [0]>} : vector<4x8x8xbf16>, vector<4x8x32xbf16>, vector<4x8x32xf32> -> vector<4x8x32xf32>
    "tpu.trace_stop"() : () -> ()
    %53 = vector.extract_strided_slice %52 {offsets = [0, 0, 0], sizes = [1, 8, 32], strides = [1, 1, 1]} : vector<4x8x32xf32> to vector<1x8x32xf32>
    %54 = vector.shape_cast %53 : vector<1x8x32xf32> to vector<8x32xf32>
    %55 = vector.extract_strided_slice %52 {offsets = [1, 0, 0], sizes = [1, 8, 32], strides = [1, 1, 1]} : vector<4x8x32xf32> to vector<1x8x32xf32>
    %56 = vector.shape_cast %55 : vector<1x8x32xf32> to vector<8x32xf32>
    %57 = vector.extract_strided_slice %52 {offsets = [2, 0, 0], sizes = [1, 8, 32], strides = [1, 1, 1]} : vector<4x8x32xf32> to vector<1x8x32xf32>
    %58 = vector.shape_cast %57 : vector<1x8x32xf32> to vector<8x32xf32>
    %59 = vector.extract_strided_slice %52 {offsets = [3, 0, 0], sizes = [1, 8, 32], strides = [1, 1, 1]} : vector<4x8x32xf32> to vector<1x8x32xf32>
    %60 = vector.shape_cast %59 : vector<1x8x32xf32> to vector<8x32xf32>
    %61 = tpu.concatenate %54, %56, %58, %60 in 1 : vector<8x32xf32>, vector<8x32xf32>, vector<8x32xf32>, vector<8x32xf32> -> vector<8x128xf32>
    %62 = arith.truncf %61 : vector<8x128xf32> to vector<8x128xbf16>
    %c0_10 = arith.constant 0 : index
    %c0_11 = arith.constant 0 : index
    %63 = vector.load %arg4[%c0_10, %c0_11] : memref<128x32xbf16, #tpu.memory_space<vmem>>, vector<128x32xbf16>
    %cst_12 = arith.constant dense<0.000000e+00> : vector<8x32xf32>
    %64 = tpu.matmul %62, %63, %cst_12 {dimension_numbers = #tpu.dot_dimension_numbers<[1], [0], [0], [1], [0, 0, 1, 1], [], []>} : vector<8x128xbf16>, vector<128x32xbf16>, vector<8x32xf32> -> vector<8x32xf32>
    %c0_13 = arith.constant 0 : index
    %c0_14 = arith.constant 0 : index
    %65 = vector.load %arg5[%c0_13, %c0_14] : memref<1x32xf32, #tpu.memory_space<vmem>>, vector<1x32xf32>
    %66 = vector.broadcast %65 : vector<1x32xf32> to vector<8x32xf32>
    %67 = arith.addf %64, %66 : vector<8x32xf32>
    %c0_15 = arith.constant 0 : index
    %c0_16 = arith.constant 0 : index
    %c0_17 = arith.constant 0 : index
    %68 = vector.load %arg6[%c0_15, %c0_16, %c0_17] : memref<1x8x32xf32, #tpu.memory_space<vmem>>, vector<1x8x32xf32>
    %69 = vector.shape_cast %68 : vector<1x8x32xf32> to vector<8x32xf32>
    %70 = vector.shape_cast %67 : vector<8x32xf32> to vector<1x8x32xf32>
    tpu.vector_store %arg6[%c0_15, %c0_16, %c0_17], %70 {strides = array<i32>} : memref<1x8x32xf32, #tpu.memory_space<vmem>>, vector<1x8x32xf32>,
    return
  }
  func.func @transform_0(%arg0: i32) -> (i32, i32, i32) {
    %c0_i32 = arith.constant 0 : i32
    %c0_i32_0 = arith.constant 0 : i32
    %c0_i32_1 = arith.constant 0 : i32
    return %arg0, %c0_i32, %c0_i32_0 : i32, i32, i32
  }
  func.func @transform_1(%arg0: i32) -> (i32, i32) {
    %c0_i32 = arith.constant 0 : i32
    %c0_i32_0 = arith.constant 0 : i32
    %c0_i32_1 = arith.constant 0 : i32
    return %c0_i32, %c0_i32_0 : i32, i32
  }
  func.func @transform_2(%arg0: i32) -> (i32, i32) {
    %c0_i32 = arith.constant 0 : i32
    %c0_i32_0 = arith.constant 0 : i32
    %c0_i32_1 = arith.constant 0 : i32
    return %c0_i32, %c0_i32_0 : i32, i32
  }
  func.func @transform_3(%arg0: i32) -> (i32, i32) {
    %c0_i32 = arith.constant 0 : i32
    %c0_i32_0 = arith.constant 0 : i32
    %c0_i32_1 = arith.constant 0 : i32
    return %c0_i32, %c0_i32_0 : i32, i32
  }
  func.func @transform_4(%arg0: i32) -> (i32, i32) {
    %c0_i32 = arith.constant 0 : i32
    %c0_i32_0 = arith.constant 0 : i32
    %c0_i32_1 = arith.constant 0 : i32
    return %c0_i32, %c0_i32_0 : i32, i32
  }
  func.func @transform_5(%arg0: i32) -> (i32, i32, i32) {
    %c0_i32 = arith.constant 0 : i32
    %c0_i32_0 = arith.constant 0 : i32
    %c0_i32_1 = arith.constant 0 : i32
    return %arg0, %c0_i32, %c0_i32_0 : i32, i32, i32
  }
}

</mosaic_0001>

<llo_original>
// kernel: tpu_custom_call.1
$region0: #{tpu_custom_call.1}
  #allocation0 [shape = 'u32[]', space=smem, size = 0x4, offset = 0x4, fixed_abs, tag = 'smem constant byte address 0x4 - core index']
  #allocation1 [shape = 'u32[72,128]{1,0:T(1,128)}', space=vmem, size = 0x9000, scoped, tag = 'internal scratch']
  %s0 = inlined_call_operand.vmem [shape: bf16[2,8,32], index: 0, kind: input, shape index: {}]
  %s1 = inlined_call_operand.vmem [shape: bf16[32,256], index: 1, kind: input, shape index: {}]
  %s2 = inlined_call_operand.vmem [shape: f32[1,256], index: 2, kind: input, shape index: {}]
  %s3 = inlined_call_operand.vmem [shape: bf16[128,32], index: 3, kind: input, shape index: {}]
  %s4 = inlined_call_operand.vmem [shape: f32[1,32], index: 4, kind: input, shape index: {}]
  %s5 = inlined_call_operand.hbm [shape: f32[2,8,32], index: 5, kind: output, shape index: {}]
  %s6 = sld [smem:[#allocation0]]
  $region53: #{tpu_custom_call.1} parent=0
    _
  %s8 = ssub.s32 1, %s6
  %s9 = scalar_select 0, %s8, %s6
  $region1: #{tpu_custom_call.1} parent=0
    #allocation2 [shape = 'u8[8192]{0}', space=vmem, size = 0x2000, scoped, tag = 'output window, operand 0']
    #allocation3 [shape = 's32[2]{0}', space=sflag, size = 0x8, scoped, tag = 'scoped memory for tpu_custom_call.1']
    %10 = vsyncpa [#allocation3], 0
    %s11 = scalar_lea.sflag [#allocation3], 1
    %12 = vsyncpa %s11, 0
    loop: start=0, step=1, limit=4
    $region2: #{tpu_custom_call.1} parent=1 // loop_pre_header
      _
    $region3: #{tpu_custom_call.1} parent=1 // loop_header
      %s14 = sphi 0, %s18
      %p15 = scmp.ge.s32.totalorder %s14, 4
      %s24 = sphi 0, %s26
      %s27 = sphi 0, %s24
      %s28 = sphi 0, %s27
      %s44 = sphi 0, %s28
      %s48 = sphi 0, %s48
      %s50 = sphi 0, %s48
      %s51 = sphi 0, %s50
      %s65 = sphi 0, %s51
      %s69 = sphi 0, %s69
      %s71 = sphi 0, %s69
      %s72 = sphi 0, %s71
      %s86 = sphi 0, %s72
      %s90 = sphi 0, %s90
      %s92 = sphi 0, %s90
      %s93 = sphi 0, %s92
      %s107 = sphi 0, %s93
      %s111 = sphi 0, %s111
      %s113 = sphi 0, %s111
      %s114 = sphi 0, %s113
      %s128 = sphi 0, %s114
      %s134 = sphi 0, %s136
      %s137 = sphi 0, %s134
      %s138 = sphi 0, %s137
      %s154 = sphi 0, %s138
    $region4: #{tpu_custom_call.1} parent=1 // loop_header_branch
      %17 = sbr.rel (%p15) target = $region8
    $region5: #{tpu_custom_call.1} parent=1 // loop_body
      %s19 = ssub.s32 %s14, 1
      %s20 = ssub.s32 %s14, 2
      %s21 = sadd.s32 %s14, 1
      %s22 = ssub.s32 %s14, %s21
      %p23 = scmp.eq.s32.totalorder %s22, 0
      %s25 = sadd.s32 %s24, 1
      %s26 = scalar_select %p23, %s24, %s25
      %p29 = pneg %p23
      %p30 = scmp.eq.s32.totalorder %s14, 1
      %p31 = por %p29, %p30
      %p32 = scmp.ne.s32.totalorder %s24, %s27
      %p33 = scmp.eq.s32.totalorder %s14, 0
      %p34 = por %p32, %p33
      %p35 = scmp.ne.s32.totalorder %s24, %s27
      %p36 = scmp.eq.s32.totalorder %s19, 1
      %p37 = por %p35, %p36
      %p38 = scmp.ne.s32.totalorder %s27, %s28
      %p39 = scmp.eq.s32.totalorder %s19, 0
      %p40 = por %p38, %p39
      %p41 = scmp.ne.s32.totalorder %s27, %s28
      %p42 = scmp.eq.s32.totalorder %s20, 1
      %p43 = por %p41, %p42
      %p45 = scmp.ne.s32.totalorder %s28, %s44
      %p46 = scmp.eq.s32.totalorder %s20, 0
      %p47 = por %p45, %p46
      %s49 = sadd.s32 %s48, 1
      %p52 = scmp.eq.s32.totalorder %s14, 1
      %p53 = scmp.ne.s32.totalorder %s48, %s50
      %p54 = scmp.eq.s32.totalorder %s14, 0
      %p55 = por %p53, %p54
      %p56 = scmp.ne.s32.totalorder %s48, %s50
      %p57 = scmp.eq.s32.totalorder %s19, 1
      %p58 = por %p56, %p57
      %p59 = scmp.ne.s32.totalorder %s50, %s51
      %p60 = scmp.eq.s32.totalorder %s19, 0
      %p61 = por %p59, %p60
      %p62 = scmp.ne.s32.totalorder %s50, %s51
      %p63 = scmp.eq.s32.totalorder %s20, 1
      %p64 = por %p62, %p63
      %p66 = scmp.ne.s32.totalorder %s51, %s65
      %p67 = scmp.eq.s32.totalorder %s20, 0
      %p68 = por %p66, %p67
      %s70 = sadd.s32 %s69, 1
      %p73 = scmp.eq.s32.totalorder %s14, 1
      %p74 = scmp.ne.s32.totalorder %s69, %s71
      %p75 = scmp.eq.s32.totalorder %s14, 0
      %p76 = por %p74, %p75
      %p77 = scmp.ne.s32.totalorder %s69, %s71
      %p78 = scmp.eq.s32.totalorder %s19, 1
      %p79 = por %p77, %p78
      %p80 = scmp.ne.s32.totalorder %s71, %s72
      %p81 = scmp.eq.s32.totalorder %s19, 0
      %p82 = por %p80, %p81
      %p83 = scmp.ne.s32.totalorder %s71, %s72
      %p84 = scmp.eq.s32.totalorder %s20, 1
      %p85 = por %p83, %p84
      %p87 = scmp.ne.s32.totalorder %s72, %s86
      %p88 = scmp.eq.s32.totalorder %s20, 0
      %p89 = por %p87, %p88
      %s91 = sadd.s32 %s90, 1
      %p94 = scmp.eq.s32.totalorder %s14, 1
      %p95 = scmp.ne.s32.totalorder %s90, %s92
      %p96 = scmp.eq.s32.totalorder %s14, 0
      %p97 = por %p95, %p96
      %p98 = scmp.ne.s32.totalorder %s90, %s92
      %p99 = scmp.eq.s32.totalorder %s19, 1
      %p100 = por %p98, %p99
      %p101 = scmp.ne.s32.totalorder %s92, %s93
      %p102 = scmp.eq.s32.totalorder %s19, 0
      %p103 = por %p101, %p102
      %p104 = scmp.ne.s32.totalorder %s92, %s93
      %p105 = scmp.eq.s32.totalorder %s20, 1
      %p106 = por %p104, %p105
      %p108 = scmp.ne.s32.totalorder %s93, %s107
      %p109 = scmp.eq.s32.totalorder %s20, 0
      %p110 = por %p108, %p109
      %s112 = sadd.s32 %s111, 1
      %p115 = scmp.eq.s32.totalorder %s14, 1
      %p116 = scmp.ne.s32.totalorder %s111, %s113
      %p117 = scmp.eq.s32.totalorder %s14, 0
      %p118 = por %p116, %p117
      %p119 = scmp.ne.s32.totalorder %s111, %s113
      %p120 = scmp.eq.s32.totalorder %s19, 1
      %p121 = por %p119, %p120
      %p122 = scmp.ne.s32.totalorder %s113, %s114
      %p123 = scmp.eq.s32.totalorder %s19, 0
      %p124 = por %p122, %p123
      %p125 = scmp.ne.s32.totalorder %s113, %s114
      %p126 = scmp.eq.s32.totalorder %s20, 1
      %p127 = por %p125, %p126
      %p129 = scmp.ne.s32.totalorder %s114, %s128
      %p130 = scmp.eq.s32.totalorder %s20, 0
      %p131 = por %p129, %p130
      %s132 = ssub.s32 %s14, %s21
      %p133 = scmp.eq.s32.totalorder %s132, 0
      %s135 = sadd.s32 %s134, 1
      %s136 = scalar_select %p133, %s134, %s135
      %p139 = pneg %p133
      %p140 = scmp.eq.s32.totalorder %s14, 1
      %p141 = por %p139, %p140
      %p142 = scmp.ne.s32.totalorder %s134, %s137
      %p143 = scmp.eq.s32.totalorder %s14, 0
      %p144 = por %p142, %p143
      %p145 = scmp.ne.s32.totalorder %s134, %s137
      %p146 = scmp.eq.s32.totalorder %s19, 1
      %p147 = por %p145, %p146
      %p148 = scmp.ne.s32.totalorder %s137, %s138
      %p149 = scmp.eq.s32.totalorder %s19, 0
      %p150 = por %p148, %p149
      %p151 = scmp.ne.s32.totalorder %s137, %s138
      %p152 = scmp.eq.s32.totalorder %s20, 1
      %p153 = por %p151, %p152
      %p155 = scmp.ne.s32.totalorder %s138, %s154
      %p156 = scmp.eq.s32.totalorder %s20, 0
      %p157 = por %p155, %p156
      %p158 = scmp.le.s32.totalorder 1, %s14
      %p159 = scmp.lt.s32.totalorder %s14, 3
      %p160 = pnand %p158, %p159
      %p161 = pneg %p160
      // Predicated region
      $region9: #{tpu_custom_call.1} parent=5 // pred_check
        _
      $region10: #{tpu_custom_call.1} parent=5 // pred_check_branch
        %163 = sbr.rel (%p160) target = $region12
      $region11: #{tpu_custom_call.1} parent=5 // pred_region
        %s164 = ssub.s32 %s14, 1
        // Predicated region
        $region13: #{tpu_custom_call.1} parent=11 // pred_check
          %p165 = pneg %p61
        $region14: #{tpu_custom_call.1} parent=11 // pred_check_branch
          %167 = sbr.rel (%p165) target = $region16
        $region15: #{tpu_custom_call.1} parent=11 // pred_region
          _
        $region16: #{tpu_custom_call.1} parent=11 // pred_fallthru
          _
        // Predicated region
        $region17: #{tpu_custom_call.1} parent=11 // pred_check
          %p168 = pneg %p82
        $region18: #{tpu_custom_call.1} parent=11 // pred_check_branch
          %170 = sbr.rel (%p168) target = $region20
        $region19: #{tpu_custom_call.1} parent=11 // pred_region
          _
        $region20: #{tpu_custom_call.1} parent=11 // pred_fallthru
          _
        // Predicated region
        $region21: #{tpu_custom_call.1} parent=11 // pred_check
          %p171 = pneg %p103
        $region22: #{tpu_custom_call.1} parent=11 // pred_check_branch
          %173 = sbr.rel (%p171) target = $region24
        $region23: #{tpu_custom_call.1} parent=11 // pred_region
          _
        $region24: #{tpu_custom_call.1} parent=11 // pred_fallthru
          _
        // Predicated region
        $region25: #{tpu_custom_call.1} parent=11 // pred_check
          %p174 = pneg %p124
        $region26: #{tpu_custom_call.1} parent=11 // pred_check_branch
          %176 = sbr.rel (%p174) target = $region28
        $region27: #{tpu_custom_call.1} parent=11 // pred_region
          _
        $region28: #{tpu_custom_call.1} parent=11 // pred_fallthru
          _
      $region12: #{tpu_custom_call.1} parent=5 // pred_fallthru
        _
      %p177 = scmp.lt.s32.totalorder %s14, 2
      // Predicated region
      $region29: #{tpu_custom_call.1} parent=5 // pred_check
        %p178 = pneg %p177
      $region30: #{tpu_custom_call.1} parent=5 // pred_check_branch
        %180 = sbr.rel (%p178) target = $region32
      $region31: #{tpu_custom_call.1} parent=5 // pred_region
        // Predicated region
        $region33: #{tpu_custom_call.1} parent=31 // pred_check
          %p181 = pneg %p34
        $region34: #{tpu_custom_call.1} parent=31 // pred_check_branch
          %183 = sbr.rel (%p181) target = $region36
        $region35: #{tpu_custom_call.1} parent=31 // pred_region
          %p184 = scmp.lt.s32.totalorder %s14, 1
          %s185 = scalar_select %p184, %s14, 1
          %s186 = smul.addr %s185, 4
          %s187 = scalar_lea.vmem %s0, %s186
        $region36: #{tpu_custom_call.1} parent=31 // pred_fallthru
          _
      $region32: #{tpu_custom_call.1} parent=5 // pred_fallthru
        _
      %p188 = scmp.le.s32.totalorder 1, %s14
      %p189 = scmp.lt.s32.totalorder %s14, 3
      %p190 = pnand %p188, %p189
      %p191 = pneg %p190
      // Predicated region
      $region37: #{tpu_custom_call.1} parent=5 // pred_check
        _
      $region38: #{tpu_custom_call.1} parent=5 // pred_check_branch
        %193 = sbr.rel (%p190) target = $region40
      $region39: #{tpu_custom_call.1} parent=5 // pred_region
        %s194 = ssub.s32 %s14, 1
        %p195 = scmp.lt.s32.totalorder %s19, 1
        %s196 = scalar_select %p195, %s19, 1
        %s197 = smul.addr %s196, 4
        %s198 = scalar_lea.vmem %s0, %s197
        %p199 = pneg %p40
        %p200 = pneg %p37
        %p201 = pneg %p61
        %p202 = pneg %p58
        %p203 = pneg %p82
        %p204 = pneg %p79
        %p205 = pneg %p103
        %p206 = pneg %p100
        %p207 = pneg %p124
        %p208 = pneg %p121
        %p209 = pneg %p150
        %p210 = pneg %p147
        %s211 = sand.u32 %s137, 1
        %s212 = scalar_lea.sflag [#allocation3], %s211
        %s213 = sand.u32 %s137, 1
        %s214 = smul.addr %s213, 8
        %s215 = scalar_lea.vmem [#allocation2], %s214
        %p216 = scmp.lt.s32.totalorder %s19, 1
        %s217 = scalar_select %p216, %s19, 1
        %s218 = smul.addr %s217, 4
        %s219 = scalar_lea.vmem %s0, %s218
        %v221 = vld [vmem:[%s219] sm:$0xf]
        %v222 = vld [vmem:[%s1] sm:$0xff]
        %v223 = vld [vmem:[%s1 + $0x8] sm:$0xff]
        %v224 = vld [vmem:[%s1 + $0x10] sm:$0xff]
        %v225 = vld [vmem:[%s1 + $0x18] sm:$0xff]
        %v226 = vld [vmem:[%s2] sm:$0x3]
        %v228 = vperm.slane %v226, 0
        %v229 = vperm.slane %v226, 1
        %v236 = vunpack.c.l.b16 %v222
        %v237 = vunpack.c.h.b16 %v222
        %v238 = vunpack.c.l.b16 %v223
        %v239 = vunpack.c.h.b16 %v223
        %v240 = vunpack.c.l.b16 %v224
        %v241 = vunpack.c.h.b16 %v224
        %v242 = vunpack.c.l.b16 %v225
        %v243 = vunpack.c.h.b16 %v225
        %v244 = vpack.c.b16 %v238, %v236
        %v245 = vpack.c.b16 %v239, %v237
        %v246 = vpack.c.b16 %v242, %v240
        %v247 = vpack.c.b16 %v243, %v241
        %vm252 = vcmask 261120
        %v254 = vsel %vm252, %v221, 0
        %256 = vmatpush.bf16.msra.mxu0 0
        %257 = vmatpush.bf16.msra.mxu0 0
        %258 = vmatpush.bf16.msra.mxu0 0
        %259 = vmatpush.bf16.msra.mxu0 0
        %260 = vmatpush.bf16.msra.mxu0 0
        %261 = vmatpush.bf16.msra.mxu0 0
        %262 = vmatpush.bf16.msra.mxu0 %v246
        %263 = vmatpush.bf16.msra.mxu0 %v244
        %264 = vmatmul.bf16.gmra.mxu0 %v254
        %v265 = vpop.f32.mrf.mxu0
        %v266 = vadd.f32 %v228, %v265
        %v267 = vpop.f32.mrf.mxu0
        %268 = vdwg.mxu0
        %269 = vmatpush.bf16.msra.mxu0 0
        %270 = vmatpush.bf16.msra.mxu0 0
        %271 = vmatpush.bf16.msra.mxu0 0
        %272 = vmatpush.bf16.msra.mxu0 0
        %273 = vmatpush.bf16.msra.mxu0 0
        %274 = vmatpush.bf16.msra.mxu0 0
        %275 = vmatpush.bf16.msra.mxu0 %v247
        %276 = vmatpush.bf16.msra.mxu0 %v245
        %277 = vmatmul.bf16.gmra.mxu0 %v254
        %v278 = vpop.f32.mrf.mxu0
        %v279 = vadd.f32 %v229, %v278
        %v280 = vpop.f32.mrf.mxu0
        %281 = vdwg.mxu0
        %v282 = vpack.c.bf16 %v266, %v266
        %v283 = vpack.c.bf16 %v279, %v279
        %285 = vrot.lane.b32.xlu0 %v282, 112
        %v286 = vpop.permute.xlu0 %285
        %287 = vrot.lane.b32.xlu0 %v282, 96
        %v288 = vpop.permute.xlu0 %287
        %289 = vrot.lane.b32.xlu0 %v282, 80
        %v290 = vpop.permute.xlu0 %289
        %292 = vrot.lane.b32.xlu0 %v283, 96
        %v293 = vpop.permute.xlu0 %292
        %294 = vrot.lane.b32.xlu0 %v283, 64
        %v295 = vpop.permute.xlu0 %294
        %296 = vrot.lane.b32.xlu0 %v283, 32
        %v297 = vpop.permute.xlu0 %296
        %v298 = vunpack.c.l.b16 %v282
        %v299 = vpack.c.b16 %v298, %v298
        %300 = vrot.lane.b32.xlu0 %v299, 64
        %v301 = vpop.permute.xlu0 %300
        %vm302 = vcmask 130048
        %v304 = vsel %vm302, %v282, 0
        %v307 = vsel %vm302, %v301, 0
        %309 = vmatpush.bf16.xpose.msra.mxu0 0
        %310 = vmatpush.bf16.xpose.msra.mxu0 0
        %311 = vmatpush.bf16.xpose.msra.mxu0 0
        %312 = vmatpush.bf16.xpose.msra.mxu0 0
        %313 = vmatpush.bf16.xpose.msra.mxu0 0
        %314 = vmatpush.bf16.xpose.msra.mxu0 0
        %315 = vmatpush.bf16.xpose.msra.mxu0 0
        %316 = vmatpush.bf16.xpose.msra.mxu0 %v307
        %317 = vmatmul.bf16.gmra.mxu0 %v304
        %v318 = vpop.f32.mrf.mxu0
        %v319 = vadd.f32 0.0, %v318
        %v320 = vpop.f32.mrf.mxu0
        %321 = vdwg.mxu0
        %v322 = vunpack.c.l.b16 %v286
        %v323 = vpack.c.b16 %v322, %v322
        %324 = vrot.lane.b32.xlu0 %v323, 64
        %v325 = vpop.permute.xlu0 %324
        %v327 = vsel %vm302, %v286, 0
        %v330 = vsel %vm302, %v325, 0
        %332 = vmatpush.bf16.xpose.msra.mxu0 0
        %333 = vmatpush.bf16.xpose.msra.mxu0 0
        %334 = vmatpush.bf16.xpose.msra.mxu0 0
        %335 = vmatpush.bf16.xpose.msra.mxu0 0
        %336 = vmatpush.bf16.xpose.msra.mxu0 0
        %337 = vmatpush.bf16.xpose.msra.mxu0 0
        %338 = vmatpush.bf16.xpose.msra.mxu0 0
        %339 = vmatpush.bf16.xpose.msra.mxu0 %v330
        %340 = vmatmul.bf16.gmra.mxu0 %v327
        %v341 = vpop.f32.mrf.mxu0
        %v342 = vadd.f32 0.0, %v341
        %v343 = vpop.f32.mrf.mxu0
        %344 = vdwg.mxu0
        %v345 = vunpack.c.l.b16 %v288
        %v346 = vpack.c.b16 %v345, %v345
        %347 = vrot.lane.b32.xlu0 %v346, 64
        %v348 = vpop.permute.xlu0 %347
        %v350 = vsel %vm302, %v288, 0
        %v353 = vsel %vm302, %v348, 0
        %355 = vmatpush.bf16.xpose.msra.mxu0 0
        %356 = vmatpush.bf16.xpose.msra.mxu0 0
        %357 = vmatpush.bf16.xpose.msra.mxu0 0
        %358 = vmatpush.bf16.xpose.msra.mxu0 0
        %359 = vmatpush.bf16.xpose.msra.mxu0 0
        %360 = vmatpush.bf16.xpose.msra.mxu0 0
        %361 = vmatpush.bf16.xpose.msra.mxu0 0
        %362 = vmatpush.bf16.xpose.msra.mxu0 %v353
        %363 = vmatmul.bf16.gmra.mxu0 %v350
        %v364 = vpop.f32.mrf.mxu0
        %v365 = vadd.f32 0.0, %v364
        %v366 = vpop.f32.mrf.mxu0
        %367 = vdwg.mxu0
        %v368 = vunpack.c.l.b16 %v290
        %v369 = vpack.c.b16 %v368, %v368
        %370 = vrot.lane.b32.xlu0 %v369, 64
        %v371 = vpop.permute.xlu0 %370
        %v373 = vsel %vm302, %v290, 0
        %v376 = vsel %vm302, %v371, 0
        %378 = vmatpush.bf16.xpose.msra.mxu0 0
        %379 = vmatpush.bf16.xpose.msra.mxu0 0
        %380 = vmatpush.bf16.xpose.msra.mxu0 0
        %381 = vmatpush.bf16.xpose.msra.mxu0 0
        %382 = vmatpush.bf16.xpose.msra.mxu0 0
        %383 = vmatpush.bf16.xpose.msra.mxu0 0
        %384 = vmatpush.bf16.xpose.msra.mxu0 0
        %385 = vmatpush.bf16.xpose.msra.mxu0 %v376
        %386 = vmatmul.bf16.gmra.mxu0 %v373
        %v387 = vpop.f32.mrf.mxu0
        %v388 = vadd.f32 0.0, %v387
        %v389 = vpop.f32.mrf.mxu0
        %390 = vdwg.mxu0
        %vm391 = vcmask 64512
        %v392 = vsel %vm391, %v319, -inf
        %393 = vmax.xlane.f32.xlu0 %v392
        %v394 = vpop.xlane.xlu0 %393
        %v395 = vsel %vm391, %v342, -inf
        %396 = vmax.xlane.f32.xlu0 %v395
        %v397 = vpop.xlane.xlu0 %396
        %v398 = vsel %vm391, %v365, -inf
        %399 = vmax.xlane.f32.xlu0 %v398
        %v400 = vpop.xlane.xlu0 %399
        %v401 = vsel %vm391, %v388, -inf
        %402 = vmax.xlane.f32.xlu0 %v401
        %v403 = vpop.xlane.xlu0 %402
        %v404 = vsub.f32 %v319, %v394
        %v405 = vsub.f32 %v342, %v397
        %v406 = vsub.f32 %v365, %v400
        %v407 = vsub.f32 %v388, %v403
        %v408 = vmul.f32 %v404, 1.442695
        %v409 = vpow.pop %v408
        %v410 = vmul.f32 %v405, 1.442695
        %v411 = vpow.pop %v410
        %v412 = vmul.f32 %v406, 1.442695
        %v413 = vpow.pop %v412
        %v414 = vmul.f32 %v407, 1.442695
        %v415 = vpow.pop %v414
        %v416 = vsel %vm391, %v409, 0.0
        %417 = vadd.xlane.f32.xlu0 %v416
        %v418 = vpop.xlane.xlu0 %417
        %v419 = vsel %vm391, %v411, 0.0
        %420 = vadd.xlane.f32.xlu0 %v419
        %v421 = vpop.xlane.xlu0 %420
        %v422 = vsel %vm391, %v413, 0.0
        %423 = vadd.xlane.f32.xlu0 %v422
        %v424 = vpop.xlane.xlu0 %423
        %v425 = vsel %vm391, %v415, 0.0
        %426 = vadd.xlane.f32.xlu0 %v425
        %v427 = vpop.xlane.xlu0 %426
        %v428 = vrcp.pop %v418
        %v429 = vmul.f32 %v418, %v428
        %v430 = vsub.f32 1.0, %v429
        %v431 = vmul.f32 %v428, %v430
        %v432 = vadd.f32 %v428, %v431
        %vm433 = vweird.f32 %v418
        %vm434 = vweird.f32 %v428
        %vm435 = vmor %vm433, %vm434
        %v436 = vsel %vm435, %v428, %v432
        %v437 = vand.u32 2147483647, %v418
        %vm438 = vcmp.eq.f32.partialorder %v437, 8.507059e+37
        %v439 = vand.u32 %v418, 2147483648
        %v440 = vor.u32 1.1754944e-38, %v439
        %v441 = vsel %vm438, %v440, %v436
        %v442 = vrcp.pop %v421
        %v443 = vmul.f32 %v421, %v442
        %v444 = vsub.f32 1.0, %v443
        %v445 = vmul.f32 %v442, %v444
        %v446 = vadd.f32 %v442, %v445
        %vm447 = vweird.f32 %v421
        %vm448 = vweird.f32 %v442
        %vm449 = vmor %vm447, %vm448
        %v450 = vsel %vm449, %v442, %v446
        %v451 = vand.u32 2147483647, %v421
        %vm452 = vcmp.eq.f32.partialorder %v451, 8.507059e+37
        %v453 = vand.u32 %v421, 2147483648
        %v454 = vor.u32 1.1754944e-38, %v453
        %v455 = vsel %vm452, %v454, %v450
        %v456 = vrcp.pop %v424
        %v457 = vmul.f32 %v424, %v456
        %v458 = vsub.f32 1.0, %v457
        %v459 = vmul.f32 %v456, %v458
        %v460 = vadd.f32 %v456, %v459
        %vm461 = vweird.f32 %v424
        %vm462 = vweird.f32 %v456
        %vm463 = vmor %vm461, %vm462
        %v464 = vsel %vm463, %v456, %v460
        %v465 = vand.u32 2147483647, %v424
        %vm466 = vcmp.eq.f32.partialorder %v465, 8.507059e+37
        %v467 = vand.u32 %v424, 2147483648
        %v468 = vor.u32 1.1754944e-38, %v467
        %v469 = vsel %vm466, %v468, %v464
        %v470 = vrcp.pop %v427
        %v471 = vmul.f32 %v427, %v470
        %v472 = vsub.f32 1.0, %v471
        %v473 = vmul.f32 %v470, %v472
        %v474 = vadd.f32 %v470, %v473
        %vm475 = vweird.f32 %v427
        %vm476 = vweird.f32 %v470
        %vm477 = vmor %vm475, %vm476
        %v478 = vsel %vm477, %v470, %v474
        %v479 = vand.u32 2147483647, %v427
        %vm480 = vcmp.eq.f32.partialorder %v479, 8.507059e+37
        %v481 = vand.u32 %v427, 2147483648
        %v482 = vor.u32 1.1754944e-38, %v481
        %v483 = vsel %vm480, %v482, %v478
        %v484 = vmul.f32 %v409, %v441
        %v485 = vmul.f32 %v411, %v455
        %v486 = vmul.f32 %v413, %v469
        %v487 = vmul.f32 %v415, %v483
        %v488 = vpack.c.bf16 %v484, %v484
        %v489 = vpack.c.bf16 %v485, %v485
        %v490 = vpack.c.bf16 %v486, %v486
        %v491 = vpack.c.bf16 %v487, %v487
        %v493 = vsel %vm391, %v488, 0
        %vm495 = vcmask 1043456
        %v497 = vsel %vm495, %v283, 0
        %499 = vmatpush.bf16.msra.mxu0 0
        %500 = vmatpush.bf16.msra.mxu0 0
        %501 = vmatpush.bf16.msra.mxu0 0
        %502 = vmatpush.bf16.msra.mxu0 0
        %503 = vmatpush.bf16.msra.mxu0 0
        %504 = vmatpush.bf16.msra.mxu0 0
        %505 = vmatpush.bf16.msra.mxu0 0
        %506 = vmatpush.bf16.msra.mxu0 %v497
        %507 = vmatmul.bf16.gmra.mxu0 %v493
        %v508 = vpop.f32.mrf.mxu0
        %v509 = vadd.f32 0.0, %v508
        %v510 = vpop.f32.mrf.mxu0
        %511 = vdwg.mxu0
        %v513 = vsel %vm391, %v489, 0
        %v516 = vsel %vm495, %v293, 0
        %518 = vmatpush.bf16.msra.mxu0 0
        %519 = vmatpush.bf16.msra.mxu0 0
        %520 = vmatpush.bf16.msra.mxu0 0
        %521 = vmatpush.bf16.msra.mxu0 0
        %522 = vmatpush.bf16.msra.mxu0 0
        %523 = vmatpush.bf16.msra.mxu0 0
        %524 = vmatpush.bf16.msra.mxu0 0
        %525 = vmatpush.bf16.msra.mxu0 %v516
        %526 = vmatmul.bf16.gmra.mxu0 %v513
        %v527 = vpop.f32.mrf.mxu0
        %v528 = vadd.f32 0.0, %v527
        %v529 = vpop.f32.mrf.mxu0
        %530 = vdwg.mxu0
        %v532 = vsel %vm391, %v490, 0
        %v535 = vsel %vm495, %v295, 0
        %537 = vmatpush.bf16.msra.mxu0 0
        %538 = vmatpush.bf16.msra.mxu0 0
        %539 = vmatpush.bf16.msra.mxu0 0
        %540 = vmatpush.bf16.msra.mxu0 0
        %541 = vmatpush.bf16.msra.mxu0 0
        %542 = vmatpush.bf16.msra.mxu0 0
        %543 = vmatpush.bf16.msra.mxu0 0
        %544 = vmatpush.bf16.msra.mxu0 %v535
        %545 = vmatmul.bf16.gmra.mxu0 %v532
        %v546 = vpop.f32.mrf.mxu0
        %v547 = vadd.f32 0.0, %v546
        %v548 = vpop.f32.mrf.mxu0
        %549 = vdwg.mxu0
        %v551 = vsel %vm391, %v491, 0
        %v554 = vsel %vm495, %v297, 0
        %556 = vmatpush.bf16.msra.mxu0 0
        %557 = vmatpush.bf16.msra.mxu0 0
        %558 = vmatpush.bf16.msra.mxu0 0
        %559 = vmatpush.bf16.msra.mxu0 0
        %560 = vmatpush.bf16.msra.mxu0 0
        %561 = vmatpush.bf16.msra.mxu0 0
        %562 = vmatpush.bf16.msra.mxu0 0
        %563 = vmatpush.bf16.msra.mxu0 %v554
        %564 = vmatmul.bf16.gmra.mxu0 %v551
        %v565 = vpop.f32.mrf.mxu0
        %v566 = vadd.f32 0.0, %v565
        %v567 = vpop.f32.mrf.mxu0
        %568 = vdwg.mxu0
        %570 = vrot.lane.b32.xlu0 %v528, 32
        %v571 = vpop.permute.xlu0 %570
        %574 = vrot.lane.b32.xlu0 %v547, 64
        %v575 = vpop.permute.xlu0 %574
        %578 = vrot.lane.b32.xlu0 %v566, 96
        %v579 = vpop.permute.xlu0 %578
        %v581 = vsel %vm252, %v509, %v571
        %vm582 = vcmask 523264
        %v583 = vsel %vm582, %v581, %v575
        %vm584 = vcmask 785408
        %v585 = vsel %vm584, %v583, %v579
        %v586 = vpack.c.bf16 %v585, %v585
        %v587 = vld [vmem:[%s3] sm:$0xf]
        %v588 = vld [vmem:[%s3 + $0x4] sm:$0xf]
        %v589 = vld [vmem:[%s3 + $0x8] sm:$0xf]
        %v590 = vld [vmem:[%s3 + $0xc] sm:$0xf]
        %v591 = vld [vmem:[%s3 + $0x10] sm:$0xf]
        %v592 = vld [vmem:[%s3 + $0x14] sm:$0xf]
        %v593 = vld [vmem:[%s3 + $0x18] sm:$0xf]
        %v594 = vld [vmem:[%s3 + $0x1c] sm:$0xf]
        %v595 = vld [vmem:[%s3 + $0x20] sm:$0xf]
        %v596 = vld [vmem:[%s3 + $0x24] sm:$0xf]
        %v597 = vld [vmem:[%s3 + $0x28] sm:$0xf]
        %v598 = vld [vmem:[%s3 + $0x2c] sm:$0xf]
        %v599 = vld [vmem:[%s3 + $0x30] sm:$0xf]
        %v600 = vld [vmem:[%s3 + $0x34] sm:$0xf]
        %v601 = vld [vmem:[%s3 + $0x38] sm:$0xf]
        %v602 = vld [vmem:[%s3 + $0x3c] sm:$0xf]
        %v603 = vld [vmem:[%s4] sm:$0x1]
        %v605 = vperm.slane %v603, 0
        %v623 = vunpack.c.l.b16 %v587
        %v624 = vunpack.c.l.b16 %v588
        %v625 = vunpack.c.l.b16 %v589
        %v626 = vunpack.c.l.b16 %v590
        %v627 = vunpack.c.l.b16 %v591
        %v628 = vunpack.c.l.b16 %v592
        %v629 = vunpack.c.l.b16 %v593
        %v630 = vunpack.c.l.b16 %v594
        %v631 = vunpack.c.l.b16 %v595
        %v632 = vunpack.c.l.b16 %v596
        %v633 = vunpack.c.l.b16 %v597
        %v634 = vunpack.c.l.b16 %v598
        %v635 = vunpack.c.l.b16 %v599
        %v636 = vunpack.c.l.b16 %v600
        %v637 = vunpack.c.l.b16 %v601
        %v638 = vunpack.c.l.b16 %v602
        %v639 = vpack.c.b16 %v624, %v623
        %v640 = vpack.c.b16 %v626, %v625
        %v641 = vpack.c.b16 %v628, %v627
        %v642 = vpack.c.b16 %v630, %v629
        %v643 = vpack.c.b16 %v632, %v631
        %v644 = vpack.c.b16 %v634, %v633
        %v645 = vpack.c.b16 %v636, %v635
        %v646 = vpack.c.b16 %v638, %v637
        %655 = vmatpush.bf16.msra.mxu0 %v646
        %656 = vmatpush.bf16.msra.mxu0 %v645
        %657 = vmatpush.bf16.msra.mxu0 %v644
        %658 = vmatpush.bf16.msra.mxu0 %v643
        %659 = vmatpush.bf16.msra.mxu0 %v642
        %660 = vmatpush.bf16.msra.mxu0 %v641
        %661 = vmatpush.bf16.msra.mxu0 %v640
        %662 = vmatpush.bf16.msra.mxu0 %v639
        %663 = vmatmul.bf16.gmra.mxu0 %v586
        %v664 = vpop.f32.mrf.mxu0
        %v665 = vadd.f32 %v605, %v664
        %v666 = vpop.f32.mrf.mxu0
        %667 = vdwg.mxu0
        %668 = vst.msk [vmem:[%s215] sm:$0xff] %vm252, %v665
        %s669 = sand.u32 %s137, 1
        %s670 = scalar_lea.sflag [#allocation3], %s669
        %s671 = sand.u32 %s137, 1
        %s672 = smul.addr %s671, 8
        %s673 = scalar_lea.vmem [#allocation2], %s672
        // Predicated region
        $region41: #{tpu_custom_call.1} parent=39 // pred_check
          %p674 = pneg %p147
        $region42: #{tpu_custom_call.1} parent=39 // pred_check_branch
          %676 = sbr.rel (%p674) target = $region44
        $region43: #{tpu_custom_call.1} parent=39 // pred_region
          %678 = vsyncadd %s670, 0
          %s679 = smul.addr %s19, 8
          %s680 = scalar_lea.hbm %s5, %s679
          %s682 = sshll.u32 %s673, 4
          %s683 = int_to_ptr.vmem [resolvable:$true] %s682
          %s684 = sshll.u32 %s680, 4
          %s685 = int_to_ptr.hbm [resolvable:$true] %s684
          %687 = dma.vmem_to_hbm [thread:$0]  %s683, 128, %s685, %s670
        $region44: #{tpu_custom_call.1} parent=39 // pred_fallthru
          _
      $region40: #{tpu_custom_call.1} parent=5 // pred_fallthru
        _
      %p688 = scmp.le.s32.totalorder 2, %s14
      // Predicated region
      $region45: #{tpu_custom_call.1} parent=5 // pred_check
        %p689 = pneg %p688
      $region46: #{tpu_custom_call.1} parent=5 // pred_check_branch
        %691 = sbr.rel (%p689) target = $region48
      $region47: #{tpu_custom_call.1} parent=5 // pred_region
        %s692 = ssub.s32 %s14, 2
        // Predicated region
        $region49: #{tpu_custom_call.1} parent=47 // pred_check
          %p693 = pneg %p153
        $region50: #{tpu_custom_call.1} parent=47 // pred_check_branch
          %695 = sbr.rel (%p693) target = $region52
        $region51: #{tpu_custom_call.1} parent=47 // pred_region
          %s696 = sand.u32 %s138, 1
          %s697 = scalar_lea.sflag [#allocation3], %s696
          %s698 = sand.u32 %s138, 1
          %s699 = smul.addr %s698, 8
          %s700 = scalar_lea.vmem [#allocation2], %s699
          %702 = dma.done %s697, 128
        $region52: #{tpu_custom_call.1} parent=47 // pred_fallthru
          _
      $region48: #{tpu_custom_call.1} parent=5 // pred_fallthru
        _
    $region6: #{tpu_custom_call.1} parent=1 // loop_footer
      %s18 = sadd.s32 1, %s14
    $region7: #{tpu_custom_call.1} parent=1 // loop_footer_branch
      %13 = sbr.rel target = $region3
    $region8: #{tpu_custom_call.1} parent=1 // loop_exit
      _
    %703 = vsyncpa [#allocation3], 1
    %s704 = scalar_lea.sflag [#allocation3], 1
    %705 = vsyncpa %s704, 1

</llo_original>
